<compile_context>
chip_gen: v7x
topology: tpu7x:2x2x1
jax: 0.10.0
libtpu: 0.0.40
codegen_flags: <defaults>
</compile_context>

<pallas_src>
import jax
import jax.numpy as jnp
from jax.experimental import pallas as pl
from jax.experimental.pallas import tpu as pltpu

KH = KW = 3          # Conv2d kwargs chosen as the standard UNet ConvBlock: kernel_size=3, stride=1, padding=1
BN_EPS = 1e-5


def _fused_conv_bn_relu_kernel(p_ref, w_ref, g_ref, b_ref, o_ref):
    # p_ref: (K, M)     bf16 im2col patches, rows ordered (kh, kw, cin), cols (n, h, w)
    # w_ref: (Cout, K)  bf16 conv weight, cols ordered (kh, kw, cin)
    # g_ref: (Cout, 1)  f32 BN gamma
    # b_ref: (Cout, 1)  f32 BN beta
    # o_ref: (Cout, M)  f32 output (lane-dense: M is a multiple of 128)
    y = jnp.dot(w_ref[...], p_ref[...],
                preferred_element_type=jnp.float32)          # (Cout, M) single MXU matmul
    m = y.shape[1]
    inv_m = 1.0 / m

    # Single-pass batch statistics per output channel (f32).
    s = jnp.sum(y, axis=1, keepdims=True)                    # (Cout, 1)
    ss = jnp.sum(y * y, axis=1, keepdims=True)               # (Cout, 1)
    mean = s * inv_m
    var = ss * inv_m - mean * mean                           # biased variance (PyTorch BN normalization)
    scale = jax.lax.rsqrt(var + BN_EPS) * g_ref[...]         # fold gamma into the scale

    o_ref[...] = jnp.maximum((y - mean) * scale + b_ref[...], 0.0)


def conv_block(x_nchw, w_oihw, conv_bias, gamma, beta):
    """Forward pass of ConvBlock. x_nchw: (N, Cin, H, W), w_oihw: (Cout, Cin, 3, 3)."""
    N, Cin, H, W = x_nchw.shape
    Cout = w_oihw.shape[0]
    K = KH * KW * Cin
    M = N * H * W

    # ---- wrapper-side data movement (stays in NCHW, no NHWC transposes) ----------
    x_pad = jnp.pad(x_nchw, ((0, 0), (0, 0), (1, 1), (1, 1)))            # padding=1
    taps = [x_pad[:, :, kh:kh + H, kw:kw + W]                            # (N, Cin, H, W) each
            for kh in range(KH) for kw in range(KW)]
    patches = jnp.stack(taps, axis=0)                                    # (9, N, Cin, H, W)
    patches = jnp.transpose(patches, (0, 2, 1, 3, 4)).reshape(K, M)      # rows (kh,kw,cin), cols (n,h,w)
    patches = patches.astype(jnp.bfloat16)

    w_mat = jnp.transpose(w_oihw, (0, 2, 3, 1)).reshape(Cout, K).astype(jnp.bfloat16)

    # Conv bias is a per-channel constant and is exactly cancelled by the
    # training-mode BatchNorm mean subtraction -> intentionally not used.
    del conv_bias

    g2 = gamma.reshape(Cout, 1).astype(jnp.float32)
    b2 = beta.reshape(Cout, 1).astype(jnp.float32)

    out = pl.pallas_call(
        _fused_conv_bn_relu_kernel,
        out_shape=jax.ShapeDtypeStruct((Cout, M), jnp.float32),
        grid=(1,),
        in_specs=[
            pl.BlockSpec((K, M), lambda i: (0, 0)),
            pl.BlockSpec((Cout, K), lambda i: (0, 0)),
            pl.BlockSpec((Cout, 1), lambda i: (0, 0)),
            pl.BlockSpec((Cout, 1), lambda i: (0, 0)),
        ],
        out_specs=pl.BlockSpec((Cout, M), lambda i: (0, 0)),
        compiler_params=pltpu.CompilerParams(dimension_semantics=("arbitrary",)),
    )(patches, w_mat, g2, b2)

    # (Cout, N*H*W) -> (N, Cout, H, W): contiguous reshape + one transpose.
    return jnp.transpose(out.reshape(Cout, N, H, W), (1, 0, 2, 3))


def _reference(x, w, b, gamma, beta, quantize_bf16=False):
    # Pure-JAX reference matching PyTorch ConvBlock.forward (training-mode BN).
    if quantize_bf16:
        x = x.astype(jnp.bfloat16).astype(jnp.float32)
        w = w.astype(jnp.bfloat16).astype(jnp.float32)
    y = jax.lax.conv_general_dilated(
        x, w, window_strides=(1, 1), padding=((1, 1), (1, 1)),
        dimension_numbers=("NCHW", "OIHW", "NCHW"))
    y = y + b[None, :, None, None]
    mean = jnp.mean(y, axis=(0, 2, 3), keepdims=True)
    var = jnp.mean((y - mean) ** 2, axis=(0, 2, 3), keepdims=True)
    yhat = (y - mean) * jax.lax.rsqrt(var + BN_EPS)
    return jnp.maximum(yhat * gamma[None, :, None, None] + beta[None, :, None, None], 0.0)


if __name__ == "__main__":
    # Small shapes consistent with the module: batch=2, in_channels=4, out_channels=8, spatial=16
    N, Cin, Cout, H, W = 2, 4, 8, 16, 16

    key = jax.random.PRNGKey(0)
    kx, kw, kb, kg, kbt = jax.random.split(key, 5)
    x = jax.random.normal(kx, (N, Cin, H, W), jnp.float32)
    w = 0.1 * jax.random.normal(kw, (Cout, Cin, KH, KW), jnp.float32)
    b = 0.1 * jax.random.normal(kb, (Cout,), jnp.float32)
    gamma = 1.0 + 0.1 * jax.random.normal(kg, (Cout,), jnp.float32)
    beta = 0.1 * jax.random.normal(kbt, (Cout,), jnp.float32)

    out = conv_block(x, w, b, gamma, beta)
    out = jax.block_until_ready(out)
    assert out.shape == (N, Cout, H, W)

    # Tight check vs a reference using the same bf16-quantized conv operands
    # (isolates kernel math: matmul accumulation, BN, ReLU).
    ref_bf16 = _reference(x, w, b, gamma, beta, quantize_bf16=True)
    assert jnp.allclose(out, ref_bf16, atol=2e-3, rtol=2e-3), "mismatch vs bf16-operand reference"

    # Sanity check vs the full-f32 PyTorch-equivalent reference; tolerance reflects
    # bf16 quantization of the MXU operands only.
    ref_f32 = _reference(x, w, b, gamma, beta, quantize_bf16=False)
    assert jnp.allclose(out, ref_f32, atol=5e-2, rtol=5e-2), "mismatch vs f32 reference"

    print("KERNEL_OK")
</pallas_src>

<mosaic_0001>
module attributes {stable_mosaic.version = 11 : i64} {
  func.func @_fused_conv_bn_relu_kernel(%arg0: i32, %arg1: memref<36x512xbf16, #tpu.memory_space<vmem>>, %arg2: memref<8x36xbf16, #tpu.memory_space<vmem>>, %arg3: memref<8x1xf32, #tpu.memory_space<vmem>>, %arg4: memref<8x1xf32, #tpu.memory_space<vmem>>, %arg5: memref<8x512xf32, #tpu.memory_space<vmem>>) attributes {dimension_semantics = [#tpu.dimension_semantics<arbitrary>], iteration_bounds = array<i64: 1>, scalar_prefetch = 0 : i64, scratch_operands = 0 : i64, tpu.core_type = #tpu.core_type<tc>, window_params = [{pipeline_mode = #tpu.pipeline_mode<synchronous>, transform_indices = @transform_0, window_bounds = array<i64: 36, 512>}, {pipeline_mode = #tpu.pipeline_mode<synchronous>, transform_indices = @transform_1, window_bounds = array<i64: 8, 36>}, {pipeline_mode = #tpu.pipeline_mode<synchronous>, transform_indices = @transform_2, window_bounds = array<i64: 8, 1>}, {pipeline_mode = #tpu.pipeline_mode<synchronous>, transform_indices = @transform_3, window_bounds = array<i64: 8, 1>}, {pipeline_mode = #tpu.pipeline_mode<synchronous>, transform_indices = @transform_4, window_bounds = array<i64: 8, 512>}]} {
    %c0 = arith.constant 0 : index
    %c0_0 = arith.constant 0 : index
    %0 = vector.load %arg2[%c0, %c0_0] : memref<8x36xbf16, #tpu.memory_space<vmem>>, vector<8x36xbf16>
    %c0_1 = arith.constant 0 : index
    %c0_2 = arith.constant 0 : index
    %1 = vector.load %arg1[%c0_1, %c0_2] : memref<36x512xbf16, #tpu.memory_space<vmem>>, vector<36x512xbf16>
    %cst = arith.constant dense<0.000000e+00> : vector<8x512xf32>
    %2 = tpu.matmul %0, %1, %cst {dimension_numbers = #tpu.dot_dimension_numbers<[1], [0], [0], [1], [0, 0, 1, 1], [], []>} : vector<8x36xbf16>, vector<36x512xbf16>, vector<8x512xf32> -> vector<8x512xf32>
    %cst_3 = arith.constant dense<0.000000e+00> : vector<8xf32>
    %3 = vector.multi_reduction <add>, %2, %cst_3 [1] : vector<8x512xf32> to vector<8xf32>
    %4 = vector.shape_cast %3 : vector<8xf32> to vector<8x1xf32>
    %5 = arith.mulf %2, %2 : vector<8x512xf32>
    %cst_4 = arith.constant dense<0.000000e+00> : vector<8xf32>
    %6 = vector.multi_reduction <add>, %5, %cst_4 [1] : vector<8x512xf32> to vector<8xf32>
    %7 = vector.shape_cast %6 : vector<8xf32> to vector<8x1xf32>
    %cst_5 = arith.constant 0.001953125 : f32
    %8 = vector.broadcast %cst_5 : f32 to vector<8x1xf32>
    %9 = arith.mulf %4, %8 : vector<8x1xf32>
    %cst_6 = arith.constant 0.001953125 : f32
    %10 = vector.broadcast %cst_6 : f32 to vector<8x1xf32>
    %11 = arith.mulf %7, %10 : vector<8x1xf32>
    %12 = arith.mulf %9, %9 : vector<8x1xf32>
    %13 = arith.subf %11, %12 : vector<8x1xf32>
    %cst_7 = arith.constant 9.99999974E-6 : f32
    %14 = vector.broadcast %cst_7 : f32 to vector<8x1xf32>
    %15 = arith.addf %13, %14 : vector<8x1xf32>
    %16 = math.rsqrt %15 : vector<8x1xf32>
    %c0_8 = arith.constant 0 : index
    %c0_9 = arith.constant 0 : index
    %17 = vector.load %arg3[%c0_8, %c0_9] : memref<8x1xf32, #tpu.memory_space<vmem>>, vector<8x1xf32>
    %18 = arith.mulf %16, %17 : vector<8x1xf32>
    %19 = vector.broadcast %9 : vector<8x1xf32> to vector<8x512xf32>
    %20 = arith.subf %2, %19 : vector<8x512xf32>
    %21 = vector.broadcast %18 : vector<8x1xf32> to vector<8x512xf32>
    %22 = arith.mulf %20, %21 : vector<8x512xf32>
    %c0_10 = arith.constant 0 : index
    %c0_11 = arith.constant 0 : index
    %23 = vector.load %arg4[%c0_10, %c0_11] : memref<8x1xf32, #tpu.memory_space<vmem>>, vector<8x1xf32>
    %24 = vector.broadcast %23 : vector<8x1xf32> to vector<8x512xf32>
    %25 = arith.addf %22, %24 : vector<8x512xf32>
    %cst_12 = arith.constant 0.000000e+00 : f32
    %26 = vector.broadcast %cst_12 : f32 to vector<8x512xf32>
    %27 = arith.maximumf %25, %26 : vector<8x512xf32>
    %c0_13 = arith.constant 0 : index
    %c0_14 = arith.constant 0 : index
    %28 = vector.load %arg5[%c0_13, %c0_14] : memref<8x512xf32, #tpu.memory_space<vmem>>, vector<8x512xf32>
    tpu.vector_store %arg5[%c0_13, %c0_14], %27 {strides = array<i32>} : memref<8x512xf32, #tpu.memory_space<vmem>>, vector<8x512xf32>,
    return
  }
  func.func @transform_0(%arg0: i32) -> (i32, i32) {
    %c0_i32 = arith.constant 0 : i32
    %c0_i32_0 = arith.constant 0 : i32
    %c0_i32_1 = arith.constant 0 : i32
    return %c0_i32, %c0_i32_0 : i32, i32
  }
  func.func @transform_1(%arg0: i32) -> (i32, i32) {
    %c0_i32 = arith.constant 0 : i32
    %c0_i32_0 = arith.constant 0 : i32
    %c0_i32_1 = arith.constant 0 : i32
    return %c0_i32, %c0_i32_0 : i32, i32
  }
  func.func @transform_2(%arg0: i32) -> (i32, i32) {
    %c0_i32 = arith.constant 0 : i32
    %c0_i32_0 = arith.constant 0 : i32
    %c0_i32_1 = arith.constant 0 : i32
    return %c0_i32, %c0_i32_0 : i32, i32
  }
  func.func @transform_3(%arg0: i32) -> (i32, i32) {
    %c0_i32 = arith.constant 0 : i32
    %c0_i32_0 = arith.constant 0 : i32
    %c0_i32_1 = arith.constant 0 : i32
    return %c0_i32, %c0_i32_0 : i32, i32
  }
  func.func @transform_4(%arg0: i32) -> (i32, i32) {
    %c0_i32 = arith.constant 0 : i32
    %c0_i32_0 = arith.constant 0 : i32
    %c0_i32_1 = arith.constant 0 : i32
    return %c0_i32, %c0_i32_0 : i32, i32
  }
}

</mosaic_0001>

<llo_original>
// kernel: tpu_custom_call.1
$region0: #{tpu_custom_call.1}
  #allocation0 [shape = 'u32[]', space=smem, size = 0x4, offset = 0x4, fixed_abs, tag = 'smem constant byte address 0x4 - core index']
  #allocation1 [shape = 'u32[144,128]{1,0:T(1,128)}', space=vmem, size = 0x12000, scoped, tag = 'internal scratch']
  %s0 = inlined_call_operand.hbm [shape: bf16[36,512], index: 0, kind: input, shape index: {}]
  %s1 = inlined_call_operand.vmem [shape: bf16[8,36], index: 1, kind: input, shape index: {}]
  %s2 = inlined_call_operand.vmem [shape: f32[8,1], index: 2, kind: input, shape index: {}]
  %s3 = inlined_call_operand.vmem [shape: f32[8,1], index: 3, kind: input, shape index: {}]
  %s4 = inlined_call_operand.hbm [shape: f32[8,512], index: 4, kind: output, shape index: {}]
  %s5 = sld [smem:[#allocation0]]
  $region30: #{tpu_custom_call.1} parent=0
    _
  %s7 = ssub.s32 1, %s5
  %s8 = scalar_select 0, %s7, %s5
  $region1: #{tpu_custom_call.1} parent=0
    #allocation2 [shape = 'u8[40960]{0}', space=vmem, size = 0xa000, scoped, tag = 'input window, operand 0, single buffered']
    #allocation3 [shape = 's32[1]{0}', space=sflag, size = 0x4, scoped, tag = 'scoped memory for tpu_custom_call.1']
    #allocation4 [shape = 's32[1]{0}', space=sflag, size = 0x4, scoped, tag = 'scoped memory for tpu_custom_call.1']
    #allocation5 [shape = 'u8[16384]{0}', space=vmem, size = 0x4000, scoped, tag = 'output window, operand 0, single buffered']
    %9 = vsyncpa [#allocation3], 0
    %10 = vsyncpa [#allocation4], 0
    // Predicated region
    $region2: #{tpu_custom_call.1} parent=1 // pred_check
      _
    $region3: #{tpu_custom_call.1} parent=1 // pred_check_branch
      %12 = sbr.rel (0) target = $region5
    $region4: #{tpu_custom_call.1} parent=1 // pred_region
      %s14 = ssub.s32 1280, 1280
      %15 = vsyncadd [#allocation3], %s14
      %s16 = sshll.u32 [#allocation2], 4
      %s17 = int_to_ptr.vmem [resolvable:$true] %s16
      %22 = dma.hbm_to_vmem [thread:$0]  %s0, 1280, %s17, [#allocation3], 256, 256, 16
    $region5: #{tpu_custom_call.1} parent=1 // pred_fallthru
      _
    // Predicated region
    $region6: #{tpu_custom_call.1} parent=1 // pred_check
      _
    $region7: #{tpu_custom_call.1} parent=1 // pred_check_branch
      %24 = sbr.rel (0) target = $region9
    $region8: #{tpu_custom_call.1} parent=1 // pred_region
      _
    $region9: #{tpu_custom_call.1} parent=1 // pred_fallthru
      _
    // Predicated region
    $region10: #{tpu_custom_call.1} parent=1 // pred_check
      _
    $region11: #{tpu_custom_call.1} parent=1 // pred_check_branch
      %26 = sbr.rel (0) target = $region13
    $region12: #{tpu_custom_call.1} parent=1 // pred_region
      _
    $region13: #{tpu_custom_call.1} parent=1 // pred_fallthru
      _
    // Predicated region
    $region14: #{tpu_custom_call.1} parent=1 // pred_check
      _
    $region15: #{tpu_custom_call.1} parent=1 // pred_check_branch
      %28 = sbr.rel (0) target = $region17
    $region16: #{tpu_custom_call.1} parent=1 // pred_region
      _
    $region17: #{tpu_custom_call.1} parent=1 // pred_fallthru
      _
    // Predicated region
    $region18: #{tpu_custom_call.1} parent=1 // pred_check
      _
    $region19: #{tpu_custom_call.1} parent=1 // pred_check_branch
      %30 = sbr.rel (0) target = $region21
    $region20: #{tpu_custom_call.1} parent=1 // pred_region
      %31 = dma.done [#allocation3], 1280
    $region21: #{tpu_custom_call.1} parent=1 // pred_fallthru
      _
    %v33 = vld [vmem:[%s1] sm:$0xf]
    %v34 = vld [vmem:[#allocation2] sm:$0xff]
    %v35 = vld [vmem:[#allocation2 + $0x8] sm:$0xff]
    %v36 = vld [vmem:[#allocation2 + $0x10] sm:$0xff]
    %v37 = vld [vmem:[#allocation2 + $0x18] sm:$0xff]
    %v38 = vld [vmem:[#allocation2 + $0x20] sm:$0xff]
    %v39 = vld [vmem:[#allocation2 + $0x28] sm:$0xff]
    %v40 = vld [vmem:[#allocation2 + $0x30] sm:$0xff]
    %v41 = vld [vmem:[#allocation2 + $0x38] sm:$0xff]
    %v42 = vld [vmem:[#allocation2 + $0x40] sm:$0x33]
    %v43 = vld [vmem:[#allocation2 + $0x48] sm:$0x33]
    %v54 = vunpack.c.l.b16 %v34
    %v55 = vunpack.c.h.b16 %v34
    %v56 = vunpack.c.l.b16 %v35
    %v57 = vunpack.c.h.b16 %v35
    %v58 = vunpack.c.l.b16 %v36
    %v59 = vunpack.c.h.b16 %v36
    %v60 = vunpack.c.l.b16 %v37
    %v61 = vunpack.c.h.b16 %v37
    %v62 = vunpack.c.l.b16 %v38
    %v63 = vunpack.c.h.b16 %v38
    %v64 = vunpack.c.l.b16 %v39
    %v65 = vunpack.c.h.b16 %v39
    %v66 = vunpack.c.l.b16 %v40
    %v67 = vunpack.c.h.b16 %v40
    %v68 = vunpack.c.l.b16 %v41
    %v69 = vunpack.c.h.b16 %v41
    %v70 = vunpack.c.l.b16 %v42
    %v71 = vunpack.c.h.b16 %v42
    %v72 = vunpack.c.l.b16 %v43
    %v73 = vunpack.c.h.b16 %v43
    %v74 = vpack.c.b16 %v58, %v54
    %v75 = vpack.c.b16 %v59, %v55
    %v76 = vpack.c.b16 %v60, %v56
    %v77 = vpack.c.b16 %v61, %v57
    %v78 = vpack.c.b16 %v66, %v62
    %v79 = vpack.c.b16 %v67, %v63
    %v80 = vpack.c.b16 %v68, %v64
    %v81 = vpack.c.b16 %v69, %v65
    %v82 = vpack.c.b16 %v70, %v70
    %v83 = vpack.c.b16 %v71, %v71
    %v84 = vpack.c.b16 %v72, %v72
    %v85 = vpack.c.b16 %v73, %v73
    %vm94 = vcmask 293888
    %v96 = vsel %vm94, %v33, 0
    %vm98 = vcmask 1041408
    %v100 = vsel %vm98, %v82, 0
    %v103 = vsel %vm98, %v83, 0
    %v106 = vsel %vm98, %v84, 0
    %v109 = vsel %vm98, %v85, 0
    %111 = vmatprep.subr.bf16.mxu0 %v75
    %112 = vmatpush1.bf16.msra.mxu0 %v74
    %113 = vmatprep.subr.bf16.mxu0 %v79
    %114 = vmatpush1.bf16.msra.mxu0 %v78
    %115 = vmatprep.subr.bf16.mxu0 %v103
    %116 = vmatpush1.bf16.msra.mxu0 %v100
    %117 = vmatprep.subr.bf16.mxu0 0
    %118 = vmatpush1.bf16.msra.mxu0 0
    %119 = vmatprep.subr.bf16.mxu0 0
    %120 = vmatpush1.bf16.msra.mxu0 0
    %121 = vmatprep.subr.bf16.mxu0 0
    %122 = vmatpush1.bf16.msra.mxu0 0
    %123 = vmatprep.subr.bf16.mxu0 0
    %124 = vmatpush1.bf16.msra.mxu0 0
    %125 = vmatprep.subr.bf16.mxu0 0
    %126 = vmatpush1.bf16.msra.mxu0 0
    %127 = vmatprep.subr.bf16.mxu0 0
    %128 = vmatpush1.bf16.msra.mxu0 0
    %129 = vmatprep.subr.bf16.mxu0 0
    %130 = vmatpush1.bf16.msra.mxu0 0
    %131 = vmatprep.subr.bf16.mxu0 0
    %132 = vmatpush1.bf16.msra.mxu0 0
    %133 = vmatprep.subr.bf16.mxu0 0
    %134 = vmatpush1.bf16.msra.mxu0 0
    %135 = vmatprep.subr.bf16.mxu0 0
    %136 = vmatpush1.bf16.msra.mxu0 0
    %137 = vmatprep.subr.bf16.mxu0 0
    %138 = vmatpush1.bf16.msra.mxu0 0
    %139 = vmatprep.subr.bf16.mxu0 0
    %140 = vmatpush1.bf16.msra.mxu0 0
    %141 = vmatprep.subr.bf16.mxu0 0
    %142 = vmatpush1.bf16.msra.mxu0 0
    %143 = vmatprep.mubr.bf16.mxu0 0
    %144 = vmatmul.mubr.bf16.gmra.mrb[0].mxu0 %v96
    %v145 = vpop.f32.mrb[0].mxu0
    %v146 = vadd.f32 0.0, %v145
    %v147 = vpop.f32.mrb[0].mxu0
    %v148 = vadd.f32 0.0, %v147
    %v149 = vpop.f32.mrb[0].mxu0
    %v150 = vpop.f32.mrb[0].mxu0
    %151 = vdwg.mxu0
    %152 = vmatprep.subr.bf16.mxu0 %v77
    %153 = vmatpush1.bf16.msra.mxu0 %v76
    %154 = vmatprep.subr.bf16.mxu0 %v81
    %155 = vmatpush1.bf16.msra.mxu0 %v80
    %156 = vmatprep.subr.bf16.mxu0 %v109
    %157 = vmatpush1.bf16.msra.mxu0 %v106
    %158 = vmatprep.subr.bf16.mxu0 0
    %159 = vmatpush1.bf16.msra.mxu0 0
    %160 = vmatprep.subr.bf16.mxu0 0
    %161 = vmatpush1.bf16.msra.mxu0 0
    %162 = vmatprep.subr.bf16.mxu0 0
    %163 = vmatpush1.bf16.msra.mxu0 0
    %164 = vmatprep.subr.bf16.mxu0 0
    %165 = vmatpush1.bf16.msra.mxu0 0
    %166 = vmatprep.subr.bf16.mxu0 0
    %167 = vmatpush1.bf16.msra.mxu0 0
    %168 = vmatprep.subr.bf16.mxu0 0
    %169 = vmatpush1.bf16.msra.mxu0 0
    %170 = vmatprep.subr.bf16.mxu0 0
    %171 = vmatpush1.bf16.msra.mxu0 0
    %172 = vmatprep.subr.bf16.mxu0 0
    %173 = vmatpush1.bf16.msra.mxu0 0
    %174 = vmatprep.subr.bf16.mxu0 0
    %175 = vmatpush1.bf16.msra.mxu0 0
    %176 = vmatprep.subr.bf16.mxu0 0
    %177 = vmatpush1.bf16.msra.mxu0 0
    %178 = vmatprep.subr.bf16.mxu0 0
    %179 = vmatpush1.bf16.msra.mxu0 0
    %180 = vmatprep.subr.bf16.mxu0 0
    %181 = vmatpush1.bf16.msra.mxu0 0
    %182 = vmatprep.subr.bf16.mxu0 0
    %183 = vmatpush1.bf16.msra.mxu0 0
    %184 = vmatprep.mubr.bf16.mxu0 0
    %185 = vmatmul.mubr.bf16.gmra.mrb[0].mxu0 %v96
    %v186 = vpop.f32.mrb[0].mxu0
    %v187 = vadd.f32 0.0, %v186
    %v188 = vpop.f32.mrb[0].mxu0
    %v189 = vadd.f32 0.0, %v188
    %v190 = vpop.f32.mrb[0].mxu0
    %v191 = vpop.f32.mrb[0].mxu0
    %192 = vdwg.mxu0
    %v193 = vadd.f32 %v146, %v148
    %v194 = vadd.f32 %v193, %v187
    %v195 = vadd.f32 %v194, %v189
    %196 = vadd.xlane.f32.xlu0 %v195
    %v197 = vpop.xlane.xlu0 %196
    %v198 = vmul.f32 %v146, %v146
    %v199 = vmul.f32 %v148, %v148
    %v200 = vmul.f32 %v187, %v187
    %v201 = vmul.f32 %v189, %v189
    %v202 = vadd.f32 %v198, %v199
    %v203 = vadd.f32 %v202, %v200
    %v204 = vadd.f32 %v203, %v201
    %205 = vadd.xlane.f32.xlu0 %v204
    %v206 = vpop.xlane.xlu0 %205
    %v207 = vmul.f32 %v197, 0.001953125
    %v208 = vmul.f32 %v206, 0.001953125
    %v209 = vmul.f32 %v207, %v207
    %v210 = vsub.f32 %v208, %v209
    %v211 = vadd.f32 %v210, 1e-05
    %v212 = vrsqrt.pop %v211
    %v213 = vld [vmem:[%s2] sm:$0xff]
    %v214 = vmul.f32 %v212, %v213
    %v215 = vsub.f32 %v146, %v207
    %v216 = vsub.f32 %v148, %v207
    %v217 = vsub.f32 %v187, %v207
    %v218 = vsub.f32 %v189, %v207
    %220 = vset.pattern.permute.xlu0 0
    %221 = vperm.xlu0 %220, %v214
    %v222 = vpop.permute.xlu0 %221
    %v224 = vmul.f32 %v215, %v222
    %v225 = vmul.f32 %v216, %v222
    %v226 = vmul.f32 %v217, %v222
    %v227 = vmul.f32 %v218, %v222
    %v228 = vld [vmem:[%s3] sm:$0xff]
    %230 = vset.pattern.permute.xlu0 0
    %231 = vperm.xlu0 %230, %v228
    %v232 = vpop.permute.xlu0 %231
    %v234 = vadd.f32 %v224, %v232
    %v235 = vadd.f32 %v225, %v232
    %v236 = vadd.f32 %v226, %v232
    %v237 = vadd.f32 %v227, %v232
    %v238 = vmax.f32 %v234, 0.0
    %v239 = vmax.f32 %v235, 0.0
    %v240 = vmax.f32 %v236, 0.0
    %v241 = vmax.f32 %v237, 0.0
    %242 = vst [vmem:[#allocation5] sm:$0xff] %v238
    %243 = vst [vmem:[#allocation5 + $0x8] sm:$0xff] %v239
    %244 = vst [vmem:[#allocation5 + $0x10] sm:$0xff] %v240
    %245 = vst [vmem:[#allocation5 + $0x18] sm:$0xff] %v241
    // Predicated region
    $region22: #{tpu_custom_call.1} parent=1 // pred_check
      _
    $region23: #{tpu_custom_call.1} parent=1 // pred_check_branch
      %247 = sbr.rel (0) target = $region25
    $region24: #{tpu_custom_call.1} parent=1 // pred_region
      %s249 = ssub.s32 512, 512
      %250 = vsyncadd [#allocation4], %s249
      %s252 = sshll.u32 [#allocation5], 4
      %s253 = int_to_ptr.vmem [resolvable:$true] %s252
      %255 = dma.vmem_to_hbm [thread:$0]  %s253, 512, %s4, [#allocation4]
    $region25: #{tpu_custom_call.1} parent=1 // pred_fallthru
      _
    // Predicated region
    $region26: #{tpu_custom_call.1} parent=1 // pred_check
      _
    $region27: #{tpu_custom_call.1} parent=1 // pred_check_branch
      %257 = sbr.rel (0) target = $region29
    $region28: #{tpu_custom_call.1} parent=1 // pred_region
      %258 = dma.done [#allocation4], 512
    $region29: #{tpu_custom_call.1} parent=1 // pred_fallthru
      _
    %259 = vsyncpa [#allocation3], 1
    %260 = vsyncpa [#allocation4], 1

</llo_original>
